<compile_context>
chip_gen: v5e
topology: v5e:2x2
jax: 0.10.0
libtpu: 0.0.40
codegen_flags: <defaults>
</compile_context>

<pallas_src>
import functools

import jax
import jax.numpy as jnp
from jax.experimental import pallas as pl
from jax.experimental.pallas import tpu as pltpu

LANE = 128       # lane width: hidden dim padded to this (VMEM-only padding).
TM_MAX = 2048    # max batch-tile rows; amortizes ~0.35 us per-grid-step overhead.


def _round_up(x, m):
    return (x + m - 1) // m * m


def _cdiv(a, b):
    return -(-a // b)


def simple_nn_kernel(x_ref,
                     w1_ref, b1_ref,
                     w2_ref, b2_ref,
                     w3_ref, b3_ref,
                     w4_ref, b4_ref,
                     o_ref):
    # Fully fused forward for one batch tile: three sigmoid-linears + final linear.
    x = x_ref[...].astype(jnp.float32)

    def sigmoid(h):
        # exp goes to the EUP slot; exact math (== jax.nn.sigmoid).
        return 1.0 / (1.0 + jnp.exp(-h))

    h = sigmoid(jnp.dot(x, w1_ref[...], preferred_element_type=jnp.float32) + b1_ref[...])
    h = sigmoid(jnp.dot(h, w2_ref[...], preferred_element_type=jnp.float32) + b2_ref[...])
    h = sigmoid(jnp.dot(h, w3_ref[...], preferred_element_type=jnp.float32) + b3_ref[...])
    y = jnp.dot(h, w4_ref[...], preferred_element_type=jnp.float32) + b4_ref[...]
    o_ref[...] = y.astype(o_ref.dtype)


def _pad_to(arr, shape):
    out = jnp.zeros(shape, jnp.float32)
    return out.at[: arr.shape[0], : arr.shape[1]].set(arr.astype(jnp.float32))


def prepare_params(params):
    """One-time prep: transpose PyTorch (out,in) weights to (in,out).
    Pad ONLY the hidden dimension to the 128-lane width (that padding never
    touches HBM activation traffic).  Input (16) and output (8) dims stay exact.
    Call this ONCE, not per forward.  Returns a dict of arrays only."""
    hidden = params["w1"].shape[0]
    in_f = params["w1"].shape[1]
    out_f = params["w4"].shape[0]
    hid_p = _round_up(hidden, LANE)

    p = {}
    p["w1"] = _pad_to(params["w1"].T, (in_f, hid_p))       # (16, 128)
    p["b1"] = _pad_to(params["b1"].reshape(1, -1), (1, hid_p))
    p["w2"] = _pad_to(params["w2"].T, (hid_p, hid_p))       # (128, 128)
    p["b2"] = _pad_to(params["b2"].reshape(1, -1), (1, hid_p))
    p["w3"] = _pad_to(params["w3"].T, (hid_p, hid_p))       # (128, 128)
    p["b3"] = _pad_to(params["b3"].reshape(1, -1), (1, hid_p))
    p["w4"] = _pad_to(params["w4"].T, (hid_p, out_f))       # (128, 8)
    p["b4"] = params["b4"].reshape(1, -1).astype(jnp.float32)  # (1, 8)
    return p


@functools.partial(jax.jit, static_argnames=("tm_max",))
def simple_nn_forward(x, prepped, *, tm_max=TM_MAX):
    """x: (B, in_features) f32.  prepped: output of prepare_params (arrays only)."""
    B, in_f = x.shape
    out_f = prepped["w4"].shape[1]          # static (comes from the array shape)

    # ---- adaptive batch tiling (all static Python ints) ----
    tm_max = max(8, _round_up(tm_max, 8))
    tm = min(tm_max, _round_up(B, 8))       # multiple of 8
    num_tiles = _cdiv(B, tm)
    if num_tiles == 1 and B >= 16:
        num_tiles = 2                        # v7x: keep both TensorCores busy
    elif num_tiles > 2 and num_tiles % 2:
        num_tiles += 1                       # balanced even tile count for dual-TC
    tm = _round_up(_cdiv(B, num_tiles), 8)   # multiple of 8, <8 dead rows per tile
    b_pad = num_tiles * tm

    # Pad only batch rows (no lane padding of activations in HBM).
    x_pad = x if b_pad == B else jnp.zeros((b_pad, in_f), x.dtype).at[:B].set(x)

    # Streamed activation input; deeper pipelining once there are enough tiles.
    act_kwargs = {"pipeline_mode": pl.Buffered(3)} if num_tiles >= 3 else {}
    x_spec = pl.BlockSpec((tm, in_f), lambda i: (i, 0), **act_kwargs)

    # Weights/biases: constant index_map -> fetched once, VMEM-resident.
    def const_spec(shape):
        return pl.BlockSpec(shape, lambda i: (0,) * len(shape))

    out_padded = pl.pallas_call(
        simple_nn_kernel,
        out_shape=jax.ShapeDtypeStruct((b_pad, out_f), jnp.float32),
        grid=(num_tiles,),
        in_specs=[
            x_spec,
            const_spec(prepped["w1"].shape), const_spec(prepped["b1"].shape),
            const_spec(prepped["w2"].shape), const_spec(prepped["b2"].shape),
            const_spec(prepped["w3"].shape), const_spec(prepped["b3"].shape),
            const_spec(prepped["w4"].shape), const_spec(prepped["b4"].shape),
        ],
        out_specs=pl.BlockSpec((tm, out_f), lambda i: (i, 0)),
        compiler_params=pltpu.CompilerParams(
            dimension_semantics=("parallel",),   # v7x: shard batch tiles across 2 TCs
            vmem_limit_bytes=32 << 20,           # v5e scoped default is only 16 MiB
        ),
    )(x_pad,
      prepped["w1"], prepped["b1"],
      prepped["w2"], prepped["b2"],
      prepped["w3"], prepped["b3"],
      prepped["w4"], prepped["b4"])

    return out_padded[:B]                    # static batch-row slice only


def init_params(key, in_neurons, hidden_neurons, out_neurons):
    """Deterministic PyTorch-style uniform(-1/sqrt(fan_in), 1/sqrt(fan_in)) init."""
    keys = jax.random.split(key, 8)
    dims = [(hidden_neurons, in_neurons),
            (hidden_neurons, hidden_neurons),
            (hidden_neurons, hidden_neurons),
            (out_neurons, hidden_neurons)]
    params = {}
    for i, (out_f, in_f) in enumerate(dims, start=1):
        bound = 1.0 / (in_f ** 0.5)
        params[f"w{i}"] = jax.random.uniform(
            keys[2 * (i - 1)], (out_f, in_f), jnp.float32, -bound, bound)
        params[f"b{i}"] = jax.random.uniform(
            keys[2 * (i - 1) + 1], (out_f,), jnp.float32, -bound, bound)
    return params


def reference_forward(x, params):
    mm = functools.partial(jnp.matmul, precision=jax.lax.Precision.HIGHEST)
    h = jax.nn.sigmoid(mm(x, params["w1"].T) + params["b1"])
    h = jax.nn.sigmoid(mm(h, params["w2"].T) + params["b2"])
    h = jax.nn.sigmoid(mm(h, params["w3"].T) + params["b3"])
    return mm(h, params["w4"].T) + params["b4"]


if __name__ == "__main__":
    in_neurons, hidden_neurons, out_neurons = 16, 32, 8

    key = jax.random.PRNGKey(0)
    key_x, key_p, key_x2 = jax.random.split(key, 3)
    params = init_params(key_p, in_neurons, hidden_neurons, out_neurons)
    prepped = prepare_params(params)   # hoisted out of the call path (done once)

    # Case 1: tiny batch (single tile, single grid step).
    x = jax.random.normal(key_x, (8, in_neurons), jnp.float32)
    out = jax.block_until_ready(simple_nn_forward(x, prepped))
    ref = reference_forward(x, params)
    assert out.shape == (8, out_neurons)
    assert jnp.allclose(out, ref, atol=1e-3, rtol=1e-3)

    # Case 2: multi-tile batch grid (tm=8 -> 4 pipelined / TC-parallel grid steps).
    x2 = jax.random.normal(key_x2, (32, in_neurons), jnp.float32)
    out2 = jax.block_until_ready(simple_nn_forward(x2, prepped, tm_max=8))
    ref2 = reference_forward(x2, params)
    assert out2.shape == (32, out_neurons)
    assert jnp.allclose(out2, ref2, atol=1e-3, rtol=1e-3)

    print("KERNEL_OK")
</pallas_src>

<mosaic_0001>
module attributes {stable_mosaic.version = 11 : i64} {
  func.func @simple_nn_kernel(%arg0: i32, %arg1: memref<8x16xf32, #tpu.memory_space<vmem>>, %arg2: memref<16x128xf32, #tpu.memory_space<vmem>>, %arg3: memref<1x128xf32, #tpu.memory_space<vmem>>, %arg4: memref<128x128xf32, #tpu.memory_space<vmem>>, %arg5: memref<1x128xf32, #tpu.memory_space<vmem>>, %arg6: memref<128x128xf32, #tpu.memory_space<vmem>>, %arg7: memref<1x128xf32, #tpu.memory_space<vmem>>, %arg8: memref<128x8xf32, #tpu.memory_space<vmem>>, %arg9: memref<1x8xf32, #tpu.memory_space<vmem>>, %arg10: memref<8x8xf32, #tpu.memory_space<vmem>>) attributes {dimension_semantics = [#tpu.dimension_semantics<parallel>], iteration_bounds = array<i64: 1>, scalar_prefetch = 0 : i64, scratch_operands = 0 : i64, tpu.core_type = #tpu.core_type<tc>, window_params = [{transform_indices = @transform_0, window_bounds = array<i64: 8, 16>}, {pipeline_mode = #tpu.pipeline_mode<synchronous>, transform_indices = @transform_1, window_bounds = array<i64: 16, 128>}, {pipeline_mode = #tpu.pipeline_mode<synchronous>, transform_indices = @transform_2, window_bounds = array<i64: 1, 128>}, {pipeline_mode = #tpu.pipeline_mode<synchronous>, transform_indices = @transform_3, window_bounds = array<i64: 128, 128>}, {pipeline_mode = #tpu.pipeline_mode<synchronous>, transform_indices = @transform_4, window_bounds = array<i64: 1, 128>}, {pipeline_mode = #tpu.pipeline_mode<synchronous>, transform_indices = @transform_5, window_bounds = array<i64: 128, 128>}, {pipeline_mode = #tpu.pipeline_mode<synchronous>, transform_indices = @transform_6, window_bounds = array<i64: 1, 128>}, {pipeline_mode = #tpu.pipeline_mode<synchronous>, transform_indices = @transform_7, window_bounds = array<i64: 128, 8>}, {pipeline_mode = #tpu.pipeline_mode<synchronous>, transform_indices = @transform_8, window_bounds = array<i64: 1, 8>}, {transform_indices = @transform_9, window_bounds = array<i64: 8, 8>}]} {
    %c0 = arith.constant 0 : index
    %c0_0 = arith.constant 0 : index
    %0 = vector.load %arg1[%c0, %c0_0] : memref<8x16xf32, #tpu.memory_space<vmem>>, vector<8x16xf32>
    %c0_1 = arith.constant 0 : index
    %c0_2 = arith.constant 0 : index
    %1 = vector.load %arg2[%c0_1, %c0_2] : memref<16x128xf32, #tpu.memory_space<vmem>>, vector<16x128xf32>
    %cst = arith.constant dense<0.000000e+00> : vector<8x128xf32>
    %2 = tpu.matmul %0, %1, %cst {dimension_numbers = #tpu.dot_dimension_numbers<[1], [0], [0], [1], [0, 0, 1, 1], [], []>} : vector<8x16xf32>, vector<16x128xf32>, vector<8x128xf32> -> vector<8x128xf32>
    %c0_3 = arith.constant 0 : index
    %c0_4 = arith.constant 0 : index
    %3 = vector.load %arg3[%c0_3, %c0_4] : memref<1x128xf32, #tpu.memory_space<vmem>>, vector<1x128xf32>
    %4 = vector.broadcast %3 : vector<1x128xf32> to vector<8x128xf32>
    %5 = arith.addf %2, %4 : vector<8x128xf32>
    %cst_5 = arith.constant 0.000000e+00 : f32
    %6 = vector.broadcast %cst_5 : f32 to vector<8x128xf32>
    %7 = arith.subf %6, %5 : vector<8x128xf32>
    %8 = math.exp %7 : vector<8x128xf32>
    %cst_6 = arith.constant 1.000000e+00 : f32
    %9 = vector.broadcast %cst_6 : f32 to vector<8x128xf32>
    %10 = arith.addf %9, %8 : vector<8x128xf32>
    %cst_7 = arith.constant 1.000000e+00 : f32
    %11 = vector.broadcast %cst_7 : f32 to vector<8x128xf32>
    %12 = arith.divf %11, %10 : vector<8x128xf32>
    %c0_8 = arith.constant 0 : index
    %c0_9 = arith.constant 0 : index
    %13 = vector.load %arg4[%c0_8, %c0_9] : memref<128x128xf32, #tpu.memory_space<vmem>>, vector<128x128xf32>
    %cst_10 = arith.constant dense<0.000000e+00> : vector<8x128xf32>
    %14 = tpu.matmul %12, %13, %cst_10 {dimension_numbers = #tpu.dot_dimension_numbers<[1], [0], [0], [1], [0, 0, 1, 1], [], []>} : vector<8x128xf32>, vector<128x128xf32>, vector<8x128xf32> -> vector<8x128xf32>
    %c0_11 = arith.constant 0 : index
    %c0_12 = arith.constant 0 : index
    %15 = vector.load %arg5[%c0_11, %c0_12] : memref<1x128xf32, #tpu.memory_space<vmem>>, vector<1x128xf32>
    %16 = vector.broadcast %15 : vector<1x128xf32> to vector<8x128xf32>
    %17 = arith.addf %14, %16 : vector<8x128xf32>
    %cst_13 = arith.constant 0.000000e+00 : f32
    %18 = vector.broadcast %cst_13 : f32 to vector<8x128xf32>
    %19 = arith.subf %18, %17 : vector<8x128xf32>
    %20 = math.exp %19 : vector<8x128xf32>
    %cst_14 = arith.constant 1.000000e+00 : f32
    %21 = vector.broadcast %cst_14 : f32 to vector<8x128xf32>
    %22 = arith.addf %21, %20 : vector<8x128xf32>
    %cst_15 = arith.constant 1.000000e+00 : f32
    %23 = vector.broadcast %cst_15 : f32 to vector<8x128xf32>
    %24 = arith.divf %23, %22 : vector<8x128xf32>
    %c0_16 = arith.constant 0 : index
    %c0_17 = arith.constant 0 : index
    %25 = vector.load %arg6[%c0_16, %c0_17] : memref<128x128xf32, #tpu.memory_space<vmem>>, vector<128x128xf32>
    %cst_18 = arith.constant dense<0.000000e+00> : vector<8x128xf32>
    %26 = tpu.matmul %24, %25, %cst_18 {dimension_numbers = #tpu.dot_dimension_numbers<[1], [0], [0], [1], [0, 0, 1, 1], [], []>} : vector<8x128xf32>, vector<128x128xf32>, vector<8x128xf32> -> vector<8x128xf32>
    %c0_19 = arith.constant 0 : index
    %c0_20 = arith.constant 0 : index
    %27 = vector.load %arg7[%c0_19, %c0_20] : memref<1x128xf32, #tpu.memory_space<vmem>>, vector<1x128xf32>
    %28 = vector.broadcast %27 : vector<1x128xf32> to vector<8x128xf32>
    %29 = arith.addf %26, %28 : vector<8x128xf32>
    %cst_21 = arith.constant 0.000000e+00 : f32
    %30 = vector.broadcast %cst_21 : f32 to vector<8x128xf32>
    %31 = arith.subf %30, %29 : vector<8x128xf32>
    %32 = math.exp %31 : vector<8x128xf32>
    %cst_22 = arith.constant 1.000000e+00 : f32
    %33 = vector.broadcast %cst_22 : f32 to vector<8x128xf32>
    %34 = arith.addf %33, %32 : vector<8x128xf32>
    %cst_23 = arith.constant 1.000000e+00 : f32
    %35 = vector.broadcast %cst_23 : f32 to vector<8x128xf32>
    %36 = arith.divf %35, %34 : vector<8x128xf32>
    %c0_24 = arith.constant 0 : index
    %c0_25 = arith.constant 0 : index
    %37 = vector.load %arg8[%c0_24, %c0_25] : memref<128x8xf32, #tpu.memory_space<vmem>>, vector<128x8xf32>
    %cst_26 = arith.constant dense<0.000000e+00> : vector<8x8xf32>
    %38 = tpu.matmul %36, %37, %cst_26 {dimension_numbers = #tpu.dot_dimension_numbers<[1], [0], [0], [1], [0, 0, 1, 1], [], []>} : vector<8x128xf32>, vector<128x8xf32>, vector<8x8xf32> -> vector<8x8xf32>
    %c0_27 = arith.constant 0 : index
    %c0_28 = arith.constant 0 : index
    %39 = vector.load %arg9[%c0_27, %c0_28] : memref<1x8xf32, #tpu.memory_space<vmem>>, vector<1x8xf32>
    %40 = vector.broadcast %39 : vector<1x8xf32> to vector<8x8xf32>
    %41 = arith.addf %38, %40 : vector<8x8xf32>
    %c0_29 = arith.constant 0 : index
    %c0_30 = arith.constant 0 : index
    %42 = vector.load %arg10[%c0_29, %c0_30] : memref<8x8xf32, #tpu.memory_space<vmem>>, vector<8x8xf32>
    tpu.vector_store %arg10[%c0_29, %c0_30], %41 {strides = array<i32>} : memref<8x8xf32, #tpu.memory_space<vmem>>, vector<8x8xf32>,
    return
  }
  func.func @transform_0(%arg0: i32) -> (i32, i32) {
    %c0_i32 = arith.constant 0 : i32
    %c0_i32_0 = arith.constant 0 : i32
    return %arg0, %c0_i32 : i32, i32
  }
  func.func @transform_1(%arg0: i32) -> (i32, i32) {
    %c0_i32 = arith.constant 0 : i32
    %c0_i32_0 = arith.constant 0 : i32
    %c0_i32_1 = arith.constant 0 : i32
    return %c0_i32, %c0_i32_0 : i32, i32
  }
  func.func @transform_2(%arg0: i32) -> (i32, i32) {
    %c0_i32 = arith.constant 0 : i32
    %c0_i32_0 = arith.constant 0 : i32
    %c0_i32_1 = arith.constant 0 : i32
    return %c0_i32, %c0_i32_0 : i32, i32
  }
  func.func @transform_3(%arg0: i32) -> (i32, i32) {
    %c0_i32 = arith.constant 0 : i32
    %c0_i32_0 = arith.constant 0 : i32
    %c0_i32_1 = arith.constant 0 : i32
    return %c0_i32, %c0_i32_0 : i32, i32
  }
  func.func @transform_4(%arg0: i32) -> (i32, i32) {
    %c0_i32 = arith.constant 0 : i32
    %c0_i32_0 = arith.constant 0 : i32
    %c0_i32_1 = arith.constant 0 : i32
    return %c0_i32, %c0_i32_0 : i32, i32
  }
  func.func @transform_5(%arg0: i32) -> (i32, i32) {
    %c0_i32 = arith.constant 0 : i32
    %c0_i32_0 = arith.constant 0 : i32
    %c0_i32_1 = arith.constant 0 : i32
    return %c0_i32, %c0_i32_0 : i32, i32
  }
  func.func @transform_6(%arg0: i32) -> (i32, i32) {
    %c0_i32 = arith.constant 0 : i32
    %c0_i32_0 = arith.constant 0 : i32
    %c0_i32_1 = arith.constant 0 : i32
    return %c0_i32, %c0_i32_0 : i32, i32
  }
  func.func @transform_7(%arg0: i32) -> (i32, i32) {
    %c0_i32 = arith.constant 0 : i32
    %c0_i32_0 = arith.constant 0 : i32
    %c0_i32_1 = arith.constant 0 : i32
    return %c0_i32, %c0_i32_0 : i32, i32
  }
  func.func @transform_8(%arg0: i32) -> (i32, i32) {
    %c0_i32 = arith.constant 0 : i32
    %c0_i32_0 = arith.constant 0 : i32
    %c0_i32_1 = arith.constant 0 : i32
    return %c0_i32, %c0_i32_0 : i32, i32
  }
  func.func @transform_9(%arg0: i32) -> (i32, i32) {
    %c0_i32 = arith.constant 0 : i32
    %c0_i32_0 = arith.constant 0 : i32
    return %arg0, %c0_i32 : i32, i32
  }
}

</mosaic_0001>

<llo_original>
// kernel: simple_nn_forward.1
$region0: #{simple_nn_forward.1}
  #allocation0 [shape = 'u32[]', space=smem, size = 0x4, offset = 0x4, fixed_abs, tag = 'smem constant byte address 0x4 - core index']
  #allocation1 [shape = 'u32[72,128]{1,0:T(1,128)}', space=vmem, size = 0x9000, scoped, tag = 'internal scratch']
  %s0 = inlined_call_operand.vmem [shape: f32[8,16], index: 0, kind: input, shape index: {}]
  %s1 = inlined_call_operand.hbm [shape: f32[16,128], index: 1, kind: input, shape index: {}]
  %s2 = inlined_call_operand.vmem [shape: f32[1,128], index: 2, kind: input, shape index: {}]
  %s3 = inlined_call_operand.vmem [shape: f32[128,128], index: 3, kind: input, shape index: {}]
  %s4 = inlined_call_operand.vmem [shape: f32[1,128], index: 4, kind: input, shape index: {}]
  %s5 = inlined_call_operand.hbm [shape: f32[128,128], index: 5, kind: input, shape index: {}]
  %s6 = inlined_call_operand.vmem [shape: f32[1,128], index: 6, kind: input, shape index: {}]
  %s7 = inlined_call_operand.vmem [shape: f32[128,8], index: 7, kind: input, shape index: {}]
  %s8 = inlined_call_operand.vmem [shape: f32[1,8], index: 8, kind: input, shape index: {}]
  %s9 = inlined_call_operand.hbm [shape: f32[8,8], index: 9, kind: output, shape index: {}]
  %s10 = sld [smem:[#allocation0]]
  $region54: #{simple_nn_forward.1} parent=0
    _
  %s12 = ssub.s32 1, %s10
  %s13 = scalar_select 0, %s12, %s10
  $region1: #{simple_nn_forward.1} parent=0
    #allocation2 [shape = 'u8[8192]{0}', space=vmem, size = 0x2000, scoped, tag = 'input window, operand 1, single buffered']
    #allocation3 [shape = 's32[1]{0}', space=sflag, size = 0x4, scoped, tag = 'scoped memory for simple_nn_forward.1']
    #allocation4 [shape = 's32[1]{0}', space=sflag, size = 0x4, scoped, tag = 'scoped memory for simple_nn_forward.1']
    #allocation5 [shape = 'u8[65536]{0}', space=vmem, size = 0x10000, scoped, tag = 'input window, operand 5, single buffered']
    #allocation6 [shape = 's32[1]{0}', space=sflag, size = 0x4, scoped, tag = 'scoped memory for simple_nn_forward.1']
    #allocation7 [shape = 'u8[4096]{0}', space=vmem, size = 0x1000, scoped, tag = 'output window, operand 0, single buffered']
    %14 = vsyncpa [#allocation3], 0
    %15 = vsyncpa [#allocation6], 0
    %16 = vsyncpa [#allocation4], 0
    // Predicated region
    $region2: #{simple_nn_forward.1} parent=1 // pred_check
      _
    $region3: #{simple_nn_forward.1} parent=1 // pred_check_branch
      %18 = sbr.rel (0) target = $region5
    $region4: #{simple_nn_forward.1} parent=1 // pred_region
      _
    $region5: #{simple_nn_forward.1} parent=1 // pred_fallthru
      _
    // Predicated region
    $region6: #{simple_nn_forward.1} parent=1 // pred_check
      _
    $region7: #{simple_nn_forward.1} parent=1 // pred_check_branch
      %20 = sbr.rel (0) target = $region9
    $region8: #{simple_nn_forward.1} parent=1 // pred_region
      %22 = vsyncadd [#allocation3], 0
      %s23 = sshll.u32 %s1, 4
      %s24 = int_to_ptr.hbm [resolvable:$true] %s23
      %s25 = sshll.u32 [#allocation2], 4
      %s26 = int_to_ptr.vmem [resolvable:$true] %s25
      %31 = dma.hbm_to_vmem [thread:$0]  %s24, 256, %s26, [#allocation3], 128, 128, 8
    $region9: #{simple_nn_forward.1} parent=1 // pred_fallthru
      _
    // Predicated region
    $region10: #{simple_nn_forward.1} parent=1 // pred_check
      _
    $region11: #{simple_nn_forward.1} parent=1 // pred_check_branch
      %33 = sbr.rel (0) target = $region13
    $region12: #{simple_nn_forward.1} parent=1 // pred_region
      _
    $region13: #{simple_nn_forward.1} parent=1 // pred_fallthru
      _
    // Predicated region
    $region14: #{simple_nn_forward.1} parent=1 // pred_check
      _
    $region15: #{simple_nn_forward.1} parent=1 // pred_check_branch
      %35 = sbr.rel (0) target = $region17
    $region16: #{simple_nn_forward.1} parent=1 // pred_region
      _
    $region17: #{simple_nn_forward.1} parent=1 // pred_fallthru
      _
    // Predicated region
    $region18: #{simple_nn_forward.1} parent=1 // pred_check
      _
    $region19: #{simple_nn_forward.1} parent=1 // pred_check_branch
      %37 = sbr.rel (0) target = $region21
    $region20: #{simple_nn_forward.1} parent=1 // pred_region
      _
    $region21: #{simple_nn_forward.1} parent=1 // pred_fallthru
      _
    // Predicated region
    $region22: #{simple_nn_forward.1} parent=1 // pred_check
      _
    $region23: #{simple_nn_forward.1} parent=1 // pred_check_branch
      %39 = sbr.rel (0) target = $region25
    $region24: #{simple_nn_forward.1} parent=1 // pred_region
      %41 = vsyncadd [#allocation6], 0
      %s42 = sshll.u32 %s5, 4
      %s43 = int_to_ptr.hbm [resolvable:$true] %s42
      %s44 = sshll.u32 [#allocation5], 4
      %s45 = int_to_ptr.vmem [resolvable:$true] %s44
      %50 = dma.hbm_to_vmem [thread:$0]  %s43, 2048, %s45, [#allocation6], 128, 128, 8
    $region25: #{simple_nn_forward.1} parent=1 // pred_fallthru
      _
    // Predicated region
    $region26: #{simple_nn_forward.1} parent=1 // pred_check
      _
    $region27: #{simple_nn_forward.1} parent=1 // pred_check_branch
      %52 = sbr.rel (0) target = $region29
    $region28: #{simple_nn_forward.1} parent=1 // pred_region
      _
    $region29: #{simple_nn_forward.1} parent=1 // pred_fallthru
      _
    // Predicated region
    $region30: #{simple_nn_forward.1} parent=1 // pred_check
      _
    $region31: #{simple_nn_forward.1} parent=1 // pred_check_branch
      %54 = sbr.rel (0) target = $region33
    $region32: #{simple_nn_forward.1} parent=1 // pred_region
      _
    $region33: #{simple_nn_forward.1} parent=1 // pred_fallthru
      _
    // Predicated region
    $region34: #{simple_nn_forward.1} parent=1 // pred_check
      _
    $region35: #{simple_nn_forward.1} parent=1 // pred_check_branch
      %56 = sbr.rel (0) target = $region37
    $region36: #{simple_nn_forward.1} parent=1 // pred_region
      _
    $region37: #{simple_nn_forward.1} parent=1 // pred_fallthru
      _
    // Predicated region
    $region38: #{simple_nn_forward.1} parent=1 // pred_check
      _
    $region39: #{simple_nn_forward.1} parent=1 // pred_check_branch
      %58 = sbr.rel (0) target = $region41
    $region40: #{simple_nn_forward.1} parent=1 // pred_region
      %60 = dma.done [#allocation3], 256
    $region41: #{simple_nn_forward.1} parent=1 // pred_fallthru
      _
    // Predicated region
    $region42: #{simple_nn_forward.1} parent=1 // pred_check
      _
    $region43: #{simple_nn_forward.1} parent=1 // pred_check_branch
      %62 = sbr.rel (0) target = $region45
    $region44: #{simple_nn_forward.1} parent=1 // pred_region
      %64 = dma.done [#allocation6], 2048
    $region45: #{simple_nn_forward.1} parent=1 // pred_fallthru
      _
    %v65 = vld [vmem:[%s0] sm:$0xff]
    %v66 = vld [vmem:[#allocation2] sm:$0xff]
    %v67 = vld [vmem:[#allocation2 + $0x8] sm:$0xff]
    %v68 = vld [vmem:[%s2] sm:$0x1]
    %v70 = vperm.slane %v68, 0
    %vm72 = vcmask 130048
    %v74 = vsel %vm72, %v65, 0
    %76 = vmatpush.msra.mxu0 0.0
    %77 = vmatpush.msra.mxu0 0.0
    %78 = vmatpush.msra.mxu0 0.0
    %79 = vmatpush.msra.mxu0 0.0
    %80 = vmatpush.msra.mxu0 0.0
    %81 = vmatpush.msra.mxu0 0.0
    %82 = vmatpush.msra.mxu0 0.0
    %83 = vmatpush.msra.mxu0 0.0
    %84 = vmatpush.msra.mxu0 0.0
    %85 = vmatpush.msra.mxu0 0.0
    %86 = vmatpush.msra.mxu0 0.0
    %87 = vmatpush.msra.mxu0 0.0
    %88 = vmatpush.msra.mxu0 0.0
    %89 = vmatpush.msra.mxu0 0.0
    %90 = vmatpush.msra.mxu0 %v67
    %91 = vmatpush.msra.mxu0 %v66
    %92 = vmatmul.f32.gmra.mxu0 %v74
    %v93 = vpop.f32.mrf.mxu0
    %v94 = vadd.f32 %v70, %v93
    %95 = vdwg.mxu0
    %v96 = vsub.f32 0.0, %v94
    %v97 = vmul.f32 %v96, 1.442695
    %v98 = vpow.pop %v97
    %v99 = vadd.f32 %v98, 1.0
    %v100 = vrcp.pop %v99
    %v101 = vmul.f32 %v99, %v100
    %v102 = vsub.f32 1.0, %v101
    %v103 = vmul.f32 %v100, %v102
    %v104 = vadd.f32 %v100, %v103
    %vm105 = vweird.f32 %v99
    %vm106 = vweird.f32 %v100
    %vm107 = vmor %vm105, %vm106
    %v108 = vsel %vm107, %v100, %v104
    %v109 = vand.u32 2147483647, %v99
    %vm110 = vcmp.eq.f32.partialorder %v109, 8.507059e+37
    %v111 = vand.u32 %v99, 2147483648
    %v112 = vor.u32 1.1754944e-38, %v111
    %v113 = vsel %vm110, %v112, %v108
    %v114 = vmul.f32 1.0, %v113
    %v115 = vld [vmem:[%s3] sm:$0xff]
    %v116 = vld [vmem:[%s3 + $0x8] sm:$0xff]
    %v117 = vld [vmem:[%s3 + $0x10] sm:$0xff]
    %v118 = vld [vmem:[%s3 + $0x18] sm:$0xff]
    %v119 = vld [vmem:[%s3 + $0x20] sm:$0xff]
    %v120 = vld [vmem:[%s3 + $0x28] sm:$0xff]
    %v121 = vld [vmem:[%s3 + $0x30] sm:$0xff]
    %v122 = vld [vmem:[%s3 + $0x38] sm:$0xff]
    %v123 = vld [vmem:[%s3 + $0x40] sm:$0xff]
    %v124 = vld [vmem:[%s3 + $0x48] sm:$0xff]
    %v125 = vld [vmem:[%s3 + $0x50] sm:$0xff]
    %v126 = vld [vmem:[%s3 + $0x58] sm:$0xff]
    %v127 = vld [vmem:[%s3 + $0x60] sm:$0xff]
    %v128 = vld [vmem:[%s3 + $0x68] sm:$0xff]
    %v129 = vld [vmem:[%s3 + $0x70] sm:$0xff]
    %v130 = vld [vmem:[%s3 + $0x78] sm:$0xff]
    %v131 = vld [vmem:[%s4] sm:$0x1]
    %v133 = vperm.slane %v131, 0
    %135 = vmatpush.msra.mxu0 %v130
    %136 = vmatpush.msra.mxu0 %v129
    %137 = vmatpush.msra.mxu0 %v128
    %138 = vmatpush.msra.mxu0 %v127
    %139 = vmatpush.msra.mxu0 %v126
    %140 = vmatpush.msra.mxu0 %v125
    %141 = vmatpush.msra.mxu0 %v124
    %142 = vmatpush.msra.mxu0 %v123
    %143 = vmatpush.msra.mxu0 %v122
    %144 = vmatpush.msra.mxu0 %v121
    %145 = vmatpush.msra.mxu0 %v120
    %146 = vmatpush.msra.mxu0 %v119
    %147 = vmatpush.msra.mxu0 %v118
    %148 = vmatpush.msra.mxu0 %v117
    %149 = vmatpush.msra.mxu0 %v116
    %150 = vmatpush.msra.mxu0 %v115
    %151 = vmatmul.f32.gmra.mxu0 %v114
    %v152 = vpop.f32.mrf.mxu0
    %v153 = vadd.f32 %v133, %v152
    %154 = vdwg.mxu0
    %v155 = vsub.f32 0.0, %v153
    %v156 = vmul.f32 %v155, 1.442695
    %v157 = vpow.pop %v156
    %v158 = vadd.f32 %v157, 1.0
    %v159 = vrcp.pop %v158
    %v160 = vmul.f32 %v158, %v159
    %v161 = vsub.f32 1.0, %v160
    %v162 = vmul.f32 %v159, %v161
    %v163 = vadd.f32 %v159, %v162
    %vm164 = vweird.f32 %v158
    %vm165 = vweird.f32 %v159
    %vm166 = vmor %vm164, %vm165
    %v167 = vsel %vm166, %v159, %v163
    %v168 = vand.u32 2147483647, %v158
    %vm169 = vcmp.eq.f32.partialorder %v168, 8.507059e+37
    %v170 = vand.u32 %v158, 2147483648
    %v171 = vor.u32 1.1754944e-38, %v170
    %v172 = vsel %vm169, %v171, %v167
    %v173 = vmul.f32 1.0, %v172
    %v174 = vld [vmem:[#allocation5] sm:$0xff]
    %v175 = vld [vmem:[#allocation5 + $0x8] sm:$0xff]
    %v176 = vld [vmem:[#allocation5 + $0x10] sm:$0xff]
    %v177 = vld [vmem:[#allocation5 + $0x18] sm:$0xff]
    %v178 = vld [vmem:[#allocation5 + $0x20] sm:$0xff]
    %v179 = vld [vmem:[#allocation5 + $0x28] sm:$0xff]
    %v180 = vld [vmem:[#allocation5 + $0x30] sm:$0xff]
    %v181 = vld [vmem:[#allocation5 + $0x38] sm:$0xff]
    %v182 = vld [vmem:[#allocation5 + $0x40] sm:$0xff]
    %v183 = vld [vmem:[#allocation5 + $0x48] sm:$0xff]
    %v184 = vld [vmem:[#allocation5 + $0x50] sm:$0xff]
    %v185 = vld [vmem:[#allocation5 + $0x58] sm:$0xff]
    %v186 = vld [vmem:[#allocation5 + $0x60] sm:$0xff]
    %v187 = vld [vmem:[#allocation5 + $0x68] sm:$0xff]
    %v188 = vld [vmem:[#allocation5 + $0x70] sm:$0xff]
    %v189 = vld [vmem:[#allocation5 + $0x78] sm:$0xff]
    %v190 = vld [vmem:[%s6] sm:$0x1]
    %v192 = vperm.slane %v190, 0
    %194 = vmatpush.msra.mxu0 %v189
    %195 = vmatpush.msra.mxu0 %v188
    %196 = vmatpush.msra.mxu0 %v187
    %197 = vmatpush.msra.mxu0 %v186
    %198 = vmatpush.msra.mxu0 %v185
    %199 = vmatpush.msra.mxu0 %v184
    %200 = vmatpush.msra.mxu0 %v183
    %201 = vmatpush.msra.mxu0 %v182
    %202 = vmatpush.msra.mxu0 %v181
    %203 = vmatpush.msra.mxu0 %v180
    %204 = vmatpush.msra.mxu0 %v179
    %205 = vmatpush.msra.mxu0 %v178
    %206 = vmatpush.msra.mxu0 %v177
    %207 = vmatpush.msra.mxu0 %v176
    %208 = vmatpush.msra.mxu0 %v175
    %209 = vmatpush.msra.mxu0 %v174
    %210 = vmatmul.f32.gmra.mxu0 %v173
    %v211 = vpop.f32.mrf.mxu0
    %v212 = vadd.f32 %v192, %v211
    %213 = vdwg.mxu0
    %v214 = vsub.f32 0.0, %v212
    %v215 = vmul.f32 %v214, 1.442695
    %v216 = vpow.pop %v215
    %v217 = vadd.f32 %v216, 1.0
    %v218 = vrcp.pop %v217
    %v219 = vmul.f32 %v217, %v218
    %v220 = vsub.f32 1.0, %v219
    %v221 = vmul.f32 %v218, %v220
    %v222 = vadd.f32 %v218, %v221
    %vm223 = vweird.f32 %v217
    %vm224 = vweird.f32 %v218
    %vm225 = vmor %vm223, %vm224
    %v226 = vsel %vm225, %v218, %v222
    %v227 = vand.u32 2147483647, %v217
    %vm228 = vcmp.eq.f32.partialorder %v227, 8.507059e+37
    %v229 = vand.u32 %v217, 2147483648
    %v230 = vor.u32 1.1754944e-38, %v229
    %v231 = vsel %vm228, %v230, %v226
    %v232 = vmul.f32 1.0, %v231
    %v233 = vld [vmem:[%s7] sm:$0xff]
    %v234 = vld [vmem:[%s7 + $0x8] sm:$0xff]
    %v235 = vld [vmem:[%s7 + $0x10] sm:$0xff]
    %v236 = vld [vmem:[%s7 + $0x18] sm:$0xff]
    %v237 = vld [vmem:[%s7 + $0x20] sm:$0xff]
    %v238 = vld [vmem:[%s7 + $0x28] sm:$0xff]
    %v239 = vld [vmem:[%s7 + $0x30] sm:$0xff]
    %v240 = vld [vmem:[%s7 + $0x38] sm:$0xff]
    %v241 = vld [vmem:[%s7 + $0x40] sm:$0xff]
    %v242 = vld [vmem:[%s7 + $0x48] sm:$0xff]
    %v243 = vld [vmem:[%s7 + $0x50] sm:$0xff]
    %v244 = vld [vmem:[%s7 + $0x58] sm:$0xff]
    %v245 = vld [vmem:[%s7 + $0x60] sm:$0xff]
    %v246 = vld [vmem:[%s7 + $0x68] sm:$0xff]
    %v247 = vld [vmem:[%s7 + $0x70] sm:$0xff]
    %v248 = vld [vmem:[%s7 + $0x78] sm:$0xff]
    %v249 = vld [vmem:[%s8] sm:$0x1]
    %v251 = vperm.slane %v249, 0
    %253 = vmatpush.msra.mxu0 %v248
    %254 = vmatpush.msra.mxu0 %v247
    %255 = vmatpush.msra.mxu0 %v246
    %256 = vmatpush.msra.mxu0 %v245
    %257 = vmatpush.msra.mxu0 %v244
    %258 = vmatpush.msra.mxu0 %v243
    %259 = vmatpush.msra.mxu0 %v242
    %260 = vmatpush.msra.mxu0 %v241
    %261 = vmatpush.msra.mxu0 %v240
    %262 = vmatpush.msra.mxu0 %v239
    %263 = vmatpush.msra.mxu0 %v238
    %264 = vmatpush.msra.mxu0 %v237
    %265 = vmatpush.msra.mxu0 %v236
    %266 = vmatpush.msra.mxu0 %v235
    %267 = vmatpush.msra.mxu0 %v234
    %268 = vmatpush.msra.mxu0 %v233
    %269 = vmatmul.f32.gmra.mxu0 %v232
    %v270 = vpop.f32.mrf.mxu0
    %v271 = vadd.f32 %v251, %v270
    %272 = vdwg.mxu0
    %vm273 = vcmask 64512
    %274 = vst.msk [vmem:[#allocation7] sm:$0xff] %vm273, %v271
    // Predicated region
    $region46: #{simple_nn_forward.1} parent=1 // pred_check
      _
    $region47: #{simple_nn_forward.1} parent=1 // pred_check_branch
      %276 = sbr.rel (0) target = $region49
    $region48: #{simple_nn_forward.1} parent=1 // pred_region
      %278 = vsyncadd [#allocation4], 0
      %s280 = sshll.u32 [#allocation7], 4
      %s281 = int_to_ptr.vmem [resolvable:$true] %s280
      %s282 = sshll.u32 %s9, 4
      %s283 = int_to_ptr.hbm [resolvable:$true] %s282
      %285 = dma.vmem_to_hbm [thread:$0]  %s281, 128, %s283, [#allocation4]
    $region49: #{simple_nn_forward.1} parent=1 // pred_fallthru
      _
    // Predicated region
    $region50: #{simple_nn_forward.1} parent=1 // pred_check
      _
    $region51: #{simple_nn_forward.1} parent=1 // pred_check_branch
      %287 = sbr.rel (0) target = $region53
    $region52: #{simple_nn_forward.1} parent=1 // pred_region
      %289 = dma.done [#allocation4], 128
    $region53: #{simple_nn_forward.1} parent=1 // pred_fallthru
      _
    %290 = vsyncpa [#allocation3], 1
    %291 = vsyncpa [#allocation6], 1
    %292 = vsyncpa [#allocation4], 1

</llo_original>
